<compile_context>
chip_gen: v7x
topology: tpu7x:2x2x1
jax: 0.10.0
libtpu: 0.0.40
codegen_flags: <defaults>
</compile_context>

<pallas_src>
import jax
import jax.numpy as jnp
from jax.experimental import pallas as pl
from jax.experimental.pallas import tpu as pltpu

LANE = 128      # vreg lane width
SUBLANE = 8     # vreg sublane count (f32)


def _round_up(n, m):
    return (n + m - 1) // m * m


def mlp_kernel(x_ref, w1_ref, b1_ref, w2_ref, bn2_ref, o_ref):
    # ---- fc1: cast x to bf16 in-kernel (free VPU work), f32 accumulation ----
    x = x_ref[...].astype(w1_ref.dtype)
    h = jnp.dot(x, w1_ref[...], preferred_element_type=jnp.float32)
    h = jnp.maximum(h + b1_ref[...], 0.0)                      # bias + ReLU (f32)
    # ---- BN1 affine folded into w2/b2 in prepare_params; dropout = identity ----
    # ---- fc2 (+ folded BN1) -> ReLU -> BN2 folded affine ----
    h2 = jnp.dot(h.astype(w2_ref.dtype), w2_ref[...],
                 preferred_element_type=jnp.float32)
    b2 = bn2_ref[0:1, :]
    s2 = bn2_ref[1:2, :]
    t2 = bn2_ref[2:3, :]
    h2 = jnp.maximum(h2 + b2, 0.0)
    o_ref[...] = (h2 * s2 + t2).astype(o_ref.dtype)


def prepare_params(params, eps=1e-5):
    """Fold BatchNorm (eval mode) and cast weights. Run once per weight update."""
    w1, b1 = params["w1"], params["b1"]
    w2, b2 = params["w2"], params["b2"]

    s1 = params["g1"] / jnp.sqrt(params["rv1"] + eps)
    t1 = params["beta1"] - params["rm1"] * s1
    s2 = params["g2"] / jnp.sqrt(params["rv2"] + eps)
    t2 = params["beta2"] - params["rm2"] * s2

    # Dropout is identity in eval, so fold BN1's affine straight into fc2:
    #   (h*s1 + t1) @ w2 + b2  ==  h @ (s1[:,None] * w2) + (b2 + t1 @ w2)
    w2_eff = w2 * s1[:, None]
    b2_eff = b2 + t1 @ w2

    return {
        "w1": w1.astype(jnp.bfloat16),                                # (D_inp, D_hid)
        "b1": b1.reshape(1, -1).astype(jnp.float32),                  # (1, D_hid)
        "w2": w2_eff.astype(jnp.bfloat16),                            # (D_hid, D_out)
        "bn2": jnp.stack([b2_eff, s2, t2], 0).astype(jnp.float32),    # (3, D_out)
    }


def mlp_forward(x, prep, *, block_b=1024):
    """x: (B, D_inp) float32 (unpadded).  prep: output of prepare_params()."""
    B, D_inp = x.shape
    D_hid = prep["w1"].shape[1]
    D_out = prep["w2"].shape[1]

    # Batch tile: large to amortize per-grid-step overhead, multiple of the
    # sublane width, but capped so the grid keeps >=2 steps (v7x megacore).
    if B <= SUBLANE:
        tb = B                                   # full-dim block exception
    else:
        tb = min(block_b, _round_up(B, SUBLANE))
        if B >= 2 * SUBLANE:
            tb = min(tb, _round_up(pl.cdiv(B, 2), SUBLANE))
        tb = max(tb, SUBLANE)

    grid = (pl.cdiv(B, tb),)

    # Explicit VMEM budget (fits v7x's 64 MiB / 32 MiB-scoped per TensorCore).
    w_bytes = (prep["w1"].size * 2 + prep["w2"].size * 2
               + prep["b1"].size * 4 + prep["bn2"].size * 4)
    x_tile = tb * D_inp * 4
    o_tile = tb * D_out * 4
    h_bytes = tb * D_hid * (4 + 2)               # f32 h + bf16 copy scratch
    est = 2 * (x_tile + o_tile + w_bytes) + h_bytes
    vmem_limit = int(min(max(2 * est, 32 * 2**20), 56 * 2**20))

    const = lambda i: (0, 0)                     # weights stay VMEM-resident
    grid_spec = pltpu.PrefetchScalarGridSpec(
        num_scalar_prefetch=0,
        grid=grid,
        in_specs=[
            pl.BlockSpec((tb, D_inp), lambda i: (i, 0)),   # x: batch-streamed, unpadded
            pl.BlockSpec((D_inp, D_hid), const),           # w1 (bf16)
            pl.BlockSpec((1, D_hid), const),               # b1
            pl.BlockSpec((D_hid, D_out), const),           # w2 (BN1 folded, bf16)
            pl.BlockSpec((3, D_out), const),               # [b2_eff; s2; t2]
        ],
        out_specs=pl.BlockSpec((tb, D_out), lambda i: (i, 0)),
    )

    out = pl.pallas_call(
        mlp_kernel,
        out_shape=jax.ShapeDtypeStruct((B, D_out), jnp.float32),
        grid_spec=grid_spec,
        compiler_params=pltpu.CompilerParams(
            dimension_semantics=("parallel",),
            vmem_limit_bytes=vmem_limit),
    )(x, prep["w1"], prep["b1"], prep["w2"], prep["bn2"])

    return out


def reference_forward(x, params, eps=1e-5):
    h = jnp.maximum(x @ params["w1"] + params["b1"], 0.0)
    h = (h - params["rm1"]) / jnp.sqrt(params["rv1"] + eps) * params["g1"] + params["beta1"]
    h2 = jnp.maximum(h @ params["w2"] + params["b2"], 0.0)
    h2 = (h2 - params["rm2"]) / jnp.sqrt(params["rv2"] + eps) * params["g2"] + params["beta2"]
    return h2


if __name__ == "__main__":
    B, D_inp, D_hid = 16, 32, 32
    D_out = D_hid // 2

    key = jax.random.PRNGKey(0)
    ks = jax.random.split(key, 11)

    params = {
        # fc1: PyTorch weight is (D_hid, D_inp); stored transposed (D_inp, D_hid)
        "w1": jax.random.normal(ks[0], (D_inp, D_hid), jnp.float32) * 0.1,
        "b1": jax.random.normal(ks[1], (D_hid,), jnp.float32) * 0.1,
        "g1": 1.0 + 0.1 * jax.random.normal(ks[2], (D_hid,), jnp.float32),
        "beta1": 0.1 * jax.random.normal(ks[3], (D_hid,), jnp.float32),
        "rm1": 0.05 * jax.random.normal(ks[4], (D_hid,), jnp.float32),
        "rv1": 1.0 + 0.1 * jnp.abs(jax.random.normal(ks[5], (D_hid,), jnp.float32)),
        # fc2: PyTorch weight is (D_out, D_hid); stored transposed (D_hid, D_out)
        "w2": jax.random.normal(ks[6], (D_hid, D_out), jnp.float32) * 0.1,
        "b2": jax.random.normal(ks[7], (D_out,), jnp.float32) * 0.1,
        "g2": 1.0 + 0.1 * jax.random.normal(ks[8], (D_out,), jnp.float32),
        "beta2": 0.1 * jax.random.normal(ks[9], (D_out,), jnp.float32),
        "rm2": jnp.zeros((D_out,), jnp.float32),
        "rv2": jnp.ones((D_out,), jnp.float32),
    }

    x = jax.random.normal(ks[10], (B, D_inp), jnp.float32)

    # Parameter prep (BN folding, bf16 casts) runs once, outside the hot path.
    prep = prepare_params(params)
    prep = jax.tree_util.tree_map(jax.block_until_ready, prep)

    # Default block_b with the >=2-step cap gives tb=8, grid=2 at this tiny B;
    # production batches would use tb up to 1024 (subject to v7x VMEM budget).
    y = mlp_forward(x, prep)
    y = jax.block_until_ready(y)

    y_ref = reference_forward(x, params)
    assert y.shape == (B, D_out)
    # bf16 matmul operands with f32 accumulation -> loose-but-tight-enough tol.
    assert jnp.allclose(y, y_ref, atol=3e-2, rtol=3e-2), "mismatch vs reference"

    print("KERNEL_OK")
</pallas_src>

<mosaic_0001>
module attributes {stable_mosaic.version = 11 : i64} {
  func.func @mlp_kernel(%arg0: i32, %arg1: memref<8x32xf32, #tpu.memory_space<vmem>>, %arg2: memref<32x32xbf16, #tpu.memory_space<vmem>>, %arg3: memref<1x32xf32, #tpu.memory_space<vmem>>, %arg4: memref<32x16xbf16, #tpu.memory_space<vmem>>, %arg5: memref<3x16xf32, #tpu.memory_space<vmem>>, %arg6: memref<8x16xf32, #tpu.memory_space<vmem>>) attributes {dimension_semantics = [#tpu.dimension_semantics<parallel>], iteration_bounds = array<i64: 2>, scalar_prefetch = 0 : i64, scratch_operands = 0 : i64, tpu.core_type = #tpu.core_type<tc>, window_params = [{transform_indices = @transform_0, window_bounds = array<i64: 8, 32>}, {pipeline_mode = #tpu.pipeline_mode<synchronous>, transform_indices = @transform_1, window_bounds = array<i64: 32, 32>}, {pipeline_mode = #tpu.pipeline_mode<synchronous>, transform_indices = @transform_2, window_bounds = array<i64: 1, 32>}, {pipeline_mode = #tpu.pipeline_mode<synchronous>, transform_indices = @transform_3, window_bounds = array<i64: 32, 16>}, {pipeline_mode = #tpu.pipeline_mode<synchronous>, transform_indices = @transform_4, window_bounds = array<i64: 3, 16>}, {transform_indices = @transform_5, window_bounds = array<i64: 8, 16>}]} {
    %c0 = arith.constant 0 : index
    %c0_0 = arith.constant 0 : index
    %0 = vector.load %arg1[%c0, %c0_0] : memref<8x32xf32, #tpu.memory_space<vmem>>, vector<8x32xf32>
    %1 = arith.truncf %0 : vector<8x32xf32> to vector<8x32xbf16>
    %c0_1 = arith.constant 0 : index
    %c0_2 = arith.constant 0 : index
    %2 = vector.load %arg2[%c0_1, %c0_2] : memref<32x32xbf16, #tpu.memory_space<vmem>>, vector<32x32xbf16>
    %cst = arith.constant dense<0.000000e+00> : vector<8x32xf32>
    %3 = tpu.matmul %1, %2, %cst {dimension_numbers = #tpu.dot_dimension_numbers<[1], [0], [0], [1], [0, 0, 1, 1], [], []>} : vector<8x32xbf16>, vector<32x32xbf16>, vector<8x32xf32> -> vector<8x32xf32>
    %c0_3 = arith.constant 0 : index
    %c0_4 = arith.constant 0 : index
    %4 = vector.load %arg3[%c0_3, %c0_4] : memref<1x32xf32, #tpu.memory_space<vmem>>, vector<1x32xf32>
    %5 = vector.broadcast %4 : vector<1x32xf32> to vector<8x32xf32>
    %6 = arith.addf %3, %5 : vector<8x32xf32>
    %cst_5 = arith.constant 0.000000e+00 : f32
    %7 = vector.broadcast %cst_5 : f32 to vector<8x32xf32>
    %8 = arith.maximumf %6, %7 : vector<8x32xf32>
    %9 = arith.truncf %8 : vector<8x32xf32> to vector<8x32xbf16>
    %c0_6 = arith.constant 0 : index
    %c0_7 = arith.constant 0 : index
    %10 = vector.load %arg4[%c0_6, %c0_7] : memref<32x16xbf16, #tpu.memory_space<vmem>>, vector<32x16xbf16>
    %cst_8 = arith.constant dense<0.000000e+00> : vector<8x16xf32>
    %11 = tpu.matmul %9, %10, %cst_8 {dimension_numbers = #tpu.dot_dimension_numbers<[1], [0], [0], [1], [0, 0, 1, 1], [], []>} : vector<8x32xbf16>, vector<32x16xbf16>, vector<8x16xf32> -> vector<8x16xf32>
    %c0_9 = arith.constant 0 : index
    %c0_10 = arith.constant 0 : index
    %12 = vector.load %arg5[%c0_9, %c0_10] : memref<3x16xf32, #tpu.memory_space<vmem>>, vector<1x16xf32>
    %c1 = arith.constant 1 : index
    %c0_11 = arith.constant 0 : index
    %13 = vector.load %arg5[%c1, %c0_11] : memref<3x16xf32, #tpu.memory_space<vmem>>, vector<1x16xf32>
    %c2 = arith.constant 2 : index
    %c0_12 = arith.constant 0 : index
    %14 = vector.load %arg5[%c2, %c0_12] : memref<3x16xf32, #tpu.memory_space<vmem>>, vector<1x16xf32>
    %15 = vector.broadcast %12 : vector<1x16xf32> to vector<8x16xf32>
    %16 = arith.addf %11, %15 : vector<8x16xf32>
    %cst_13 = arith.constant 0.000000e+00 : f32
    %17 = vector.broadcast %cst_13 : f32 to vector<8x16xf32>
    %18 = arith.maximumf %16, %17 : vector<8x16xf32>
    %19 = vector.broadcast %13 : vector<1x16xf32> to vector<8x16xf32>
    %20 = arith.mulf %18, %19 : vector<8x16xf32>
    %21 = vector.broadcast %14 : vector<1x16xf32> to vector<8x16xf32>
    %22 = arith.addf %20, %21 : vector<8x16xf32>
    %c0_14 = arith.constant 0 : index
    %c0_15 = arith.constant 0 : index
    %23 = vector.load %arg6[%c0_14, %c0_15] : memref<8x16xf32, #tpu.memory_space<vmem>>, vector<8x16xf32>
    tpu.vector_store %arg6[%c0_14, %c0_15], %22 {strides = array<i32>} : memref<8x16xf32, #tpu.memory_space<vmem>>, vector<8x16xf32>,
    return
  }
  func.func @transform_0(%arg0: i32) -> (i32, i32) {
    %c0_i32 = arith.constant 0 : i32
    %c0_i32_0 = arith.constant 0 : i32
    return %arg0, %c0_i32 : i32, i32
  }
  func.func @transform_1(%arg0: i32) -> (i32, i32) {
    %c0_i32 = arith.constant 0 : i32
    %c0_i32_0 = arith.constant 0 : i32
    %c0_i32_1 = arith.constant 0 : i32
    return %c0_i32, %c0_i32_0 : i32, i32
  }
  func.func @transform_2(%arg0: i32) -> (i32, i32) {
    %c0_i32 = arith.constant 0 : i32
    %c0_i32_0 = arith.constant 0 : i32
    %c0_i32_1 = arith.constant 0 : i32
    return %c0_i32, %c0_i32_0 : i32, i32
  }
  func.func @transform_3(%arg0: i32) -> (i32, i32) {
    %c0_i32 = arith.constant 0 : i32
    %c0_i32_0 = arith.constant 0 : i32
    %c0_i32_1 = arith.constant 0 : i32
    return %c0_i32, %c0_i32_0 : i32, i32
  }
  func.func @transform_4(%arg0: i32) -> (i32, i32) {
    %c0_i32 = arith.constant 0 : i32
    %c0_i32_0 = arith.constant 0 : i32
    %c0_i32_1 = arith.constant 0 : i32
    return %c0_i32, %c0_i32_0 : i32, i32
  }
  func.func @transform_5(%arg0: i32) -> (i32, i32) {
    %c0_i32 = arith.constant 0 : i32
    %c0_i32_0 = arith.constant 0 : i32
    return %arg0, %c0_i32 : i32, i32
  }
}

</mosaic_0001>

<llo_original>
// kernel: tpu_custom_call.1
$region0: #{tpu_custom_call.1}
  #allocation0 [shape = 'u32[]', space=smem, size = 0x4, offset = 0x4, fixed_abs, tag = 'smem constant byte address 0x4 - core index']
  #allocation1 [shape = 'u32[144,128]{1,0:T(1,128)}', space=vmem, size = 0x12000, scoped, tag = 'internal scratch']
  %s0 = inlined_call_operand.vmem [shape: f32[16,32], index: 0, kind: input, shape index: {}]
  %s1 = inlined_call_operand.hbm [shape: bf16[32,32], index: 1, kind: input, shape index: {}]
  %s2 = inlined_call_operand.vmem [shape: f32[1,32], index: 2, kind: input, shape index: {}]
  %s3 = inlined_call_operand.vmem [shape: bf16[32,16], index: 3, kind: input, shape index: {}]
  %s4 = inlined_call_operand.vmem [shape: f32[3,16], index: 4, kind: input, shape index: {}]
  %s5 = inlined_call_operand.hbm [shape: f32[16,16], index: 5, kind: output, shape index: {}]
  %s6 = sld [smem:[#allocation0]]
  $region57: #{tpu_custom_call.1} parent=0
    _
  %s8 = ssub.s32 1, %s6
  %s9 = scalar_select 0, %s8, %s6
  $region1: #{tpu_custom_call.1} parent=0
    #allocation2 [shape = 'u8[8192]{0}', space=vmem, size = 0x2000, scoped, tag = 'input window, operand 1, single buffered']
    #allocation3 [shape = 's32[2]{0}', space=sflag, size = 0x8, scoped, tag = 'scoped memory for tpu_custom_call.1']
    #allocation4 [shape = 's32[2]{0}', space=sflag, size = 0x8, scoped, tag = 'scoped memory for tpu_custom_call.1']
    #allocation5 [shape = 'u8[8192]{0}', space=vmem, size = 0x2000, scoped, tag = 'output window, operand 0']
    %10 = vsyncpa [#allocation3], 0
    %11 = vsyncpa [#allocation4], 0
    %s12 = scalar_lea.sflag [#allocation4], 1
    %13 = vsyncpa %s12, 0
    loop: start=0, step=1, limit=4
    $region2: #{tpu_custom_call.1} parent=1 // loop_pre_header
      _
    $region3: #{tpu_custom_call.1} parent=1 // loop_header
      %s15 = sphi 0, %s19
      %p16 = scmp.ge.s32.totalorder %s15, 4
      %s25 = sphi 0, %s27
      %s28 = sphi 0, %s25
      %s29 = sphi 0, %s28
      %s45 = sphi 0, %s29
      %s49 = sphi 0, %s49
      %s51 = sphi 0, %s49
      %s52 = sphi 0, %s51
      %s66 = sphi 0, %s52
      %s70 = sphi 0, %s70
      %s72 = sphi 0, %s70
      %s73 = sphi 0, %s72
      %s87 = sphi 0, %s73
      %s91 = sphi 0, %s91
      %s93 = sphi 0, %s91
      %s94 = sphi 0, %s93
      %s108 = sphi 0, %s94
      %s112 = sphi 0, %s112
      %s114 = sphi 0, %s112
      %s115 = sphi 0, %s114
      %s129 = sphi 0, %s115
      %s135 = sphi 0, %s137
      %s138 = sphi 0, %s135
      %s139 = sphi 0, %s138
      %s155 = sphi 0, %s139
    $region4: #{tpu_custom_call.1} parent=1 // loop_header_branch
      %18 = sbr.rel (%p16) target = $region8
    $region5: #{tpu_custom_call.1} parent=1 // loop_body
      %s20 = ssub.s32 %s15, 1
      %s21 = ssub.s32 %s15, 2
      %s22 = sadd.s32 %s15, 1
      %s23 = ssub.s32 %s15, %s22
      %p24 = scmp.eq.s32.totalorder %s23, 0
      %s26 = sadd.s32 %s25, 1
      %s27 = scalar_select %p24, %s25, %s26
      %p30 = pneg %p24
      %p31 = scmp.eq.s32.totalorder %s15, 1
      %p32 = por %p30, %p31
      %p33 = scmp.ne.s32.totalorder %s25, %s28
      %p34 = scmp.eq.s32.totalorder %s15, 0
      %p35 = por %p33, %p34
      %p36 = scmp.ne.s32.totalorder %s25, %s28
      %p37 = scmp.eq.s32.totalorder %s20, 1
      %p38 = por %p36, %p37
      %p39 = scmp.ne.s32.totalorder %s28, %s29
      %p40 = scmp.eq.s32.totalorder %s20, 0
      %p41 = por %p39, %p40
      %p42 = scmp.ne.s32.totalorder %s28, %s29
      %p43 = scmp.eq.s32.totalorder %s21, 1
      %p44 = por %p42, %p43
      %p46 = scmp.ne.s32.totalorder %s29, %s45
      %p47 = scmp.eq.s32.totalorder %s21, 0
      %p48 = por %p46, %p47
      %s50 = sadd.s32 %s49, 1
      %p53 = scmp.eq.s32.totalorder %s15, 1
      %p54 = scmp.ne.s32.totalorder %s49, %s51
      %p55 = scmp.eq.s32.totalorder %s15, 0
      %p56 = por %p54, %p55
      %p57 = scmp.ne.s32.totalorder %s49, %s51
      %p58 = scmp.eq.s32.totalorder %s20, 1
      %p59 = por %p57, %p58
      %p60 = scmp.ne.s32.totalorder %s51, %s52
      %p61 = scmp.eq.s32.totalorder %s20, 0
      %p62 = por %p60, %p61
      %p63 = scmp.ne.s32.totalorder %s51, %s52
      %p64 = scmp.eq.s32.totalorder %s21, 1
      %p65 = por %p63, %p64
      %p67 = scmp.ne.s32.totalorder %s52, %s66
      %p68 = scmp.eq.s32.totalorder %s21, 0
      %p69 = por %p67, %p68
      %s71 = sadd.s32 %s70, 1
      %p74 = scmp.eq.s32.totalorder %s15, 1
      %p75 = scmp.ne.s32.totalorder %s70, %s72
      %p76 = scmp.eq.s32.totalorder %s15, 0
      %p77 = por %p75, %p76
      %p78 = scmp.ne.s32.totalorder %s70, %s72
      %p79 = scmp.eq.s32.totalorder %s20, 1
      %p80 = por %p78, %p79
      %p81 = scmp.ne.s32.totalorder %s72, %s73
      %p82 = scmp.eq.s32.totalorder %s20, 0
      %p83 = por %p81, %p82
      %p84 = scmp.ne.s32.totalorder %s72, %s73
      %p85 = scmp.eq.s32.totalorder %s21, 1
      %p86 = por %p84, %p85
      %p88 = scmp.ne.s32.totalorder %s73, %s87
      %p89 = scmp.eq.s32.totalorder %s21, 0
      %p90 = por %p88, %p89
      %s92 = sadd.s32 %s91, 1
      %p95 = scmp.eq.s32.totalorder %s15, 1
      %p96 = scmp.ne.s32.totalorder %s91, %s93
      %p97 = scmp.eq.s32.totalorder %s15, 0
      %p98 = por %p96, %p97
      %p99 = scmp.ne.s32.totalorder %s91, %s93
      %p100 = scmp.eq.s32.totalorder %s20, 1
      %p101 = por %p99, %p100
      %p102 = scmp.ne.s32.totalorder %s93, %s94
      %p103 = scmp.eq.s32.totalorder %s20, 0
      %p104 = por %p102, %p103
      %p105 = scmp.ne.s32.totalorder %s93, %s94
      %p106 = scmp.eq.s32.totalorder %s21, 1
      %p107 = por %p105, %p106
      %p109 = scmp.ne.s32.totalorder %s94, %s108
      %p110 = scmp.eq.s32.totalorder %s21, 0
      %p111 = por %p109, %p110
      %s113 = sadd.s32 %s112, 1
      %p116 = scmp.eq.s32.totalorder %s15, 1
      %p117 = scmp.ne.s32.totalorder %s112, %s114
      %p118 = scmp.eq.s32.totalorder %s15, 0
      %p119 = por %p117, %p118
      %p120 = scmp.ne.s32.totalorder %s112, %s114
      %p121 = scmp.eq.s32.totalorder %s20, 1
      %p122 = por %p120, %p121
      %p123 = scmp.ne.s32.totalorder %s114, %s115
      %p124 = scmp.eq.s32.totalorder %s20, 0
      %p125 = por %p123, %p124
      %p126 = scmp.ne.s32.totalorder %s114, %s115
      %p127 = scmp.eq.s32.totalorder %s21, 1
      %p128 = por %p126, %p127
      %p130 = scmp.ne.s32.totalorder %s115, %s129
      %p131 = scmp.eq.s32.totalorder %s21, 0
      %p132 = por %p130, %p131
      %s133 = ssub.s32 %s15, %s22
      %p134 = scmp.eq.s32.totalorder %s133, 0
      %s136 = sadd.s32 %s135, 1
      %s137 = scalar_select %p134, %s135, %s136
      %p140 = pneg %p134
      %p141 = scmp.eq.s32.totalorder %s15, 1
      %p142 = por %p140, %p141
      %p143 = scmp.ne.s32.totalorder %s135, %s138
      %p144 = scmp.eq.s32.totalorder %s15, 0
      %p145 = por %p143, %p144
      %p146 = scmp.ne.s32.totalorder %s135, %s138
      %p147 = scmp.eq.s32.totalorder %s20, 1
      %p148 = por %p146, %p147
      %p149 = scmp.ne.s32.totalorder %s138, %s139
      %p150 = scmp.eq.s32.totalorder %s20, 0
      %p151 = por %p149, %p150
      %p152 = scmp.ne.s32.totalorder %s138, %s139
      %p153 = scmp.eq.s32.totalorder %s21, 1
      %p154 = por %p152, %p153
      %p156 = scmp.ne.s32.totalorder %s139, %s155
      %p157 = scmp.eq.s32.totalorder %s21, 0
      %p158 = por %p156, %p157
      %p159 = scmp.le.s32.totalorder 1, %s15
      %p160 = scmp.lt.s32.totalorder %s15, 3
      %p161 = pnand %p159, %p160
      %p162 = pneg %p161
      // Predicated region
      $region9: #{tpu_custom_call.1} parent=5 // pred_check
        _
      $region10: #{tpu_custom_call.1} parent=5 // pred_check_branch
        %164 = sbr.rel (%p161) target = $region12
      $region11: #{tpu_custom_call.1} parent=5 // pred_region
        %s165 = ssub.s32 %s15, 1
        // Predicated region
        $region13: #{tpu_custom_call.1} parent=11 // pred_check
          %p166 = pneg %p62
        $region14: #{tpu_custom_call.1} parent=11 // pred_check_branch
          %168 = sbr.rel (%p166) target = $region16
        $region15: #{tpu_custom_call.1} parent=11 // pred_region
          %s170 = ssub.s32 256, 256
          %171 = vsyncadd [#allocation3], %s170
          %s172 = sshll.u32 [#allocation2], 4
          %s173 = int_to_ptr.vmem [resolvable:$true] %s172
          %178 = dma.hbm_to_vmem [thread:$0]  %s1, 256, %s173, [#allocation3], 64, 64, 4
        $region16: #{tpu_custom_call.1} parent=11 // pred_fallthru
          _
        // Predicated region
        $region17: #{tpu_custom_call.1} parent=11 // pred_check
          %p179 = pneg %p83
        $region18: #{tpu_custom_call.1} parent=11 // pred_check_branch
          %181 = sbr.rel (%p179) target = $region20
        $region19: #{tpu_custom_call.1} parent=11 // pred_region
          _
        $region20: #{tpu_custom_call.1} parent=11 // pred_fallthru
          _
        // Predicated region
        $region21: #{tpu_custom_call.1} parent=11 // pred_check
          %p182 = pneg %p104
        $region22: #{tpu_custom_call.1} parent=11 // pred_check_branch
          %184 = sbr.rel (%p182) target = $region24
        $region23: #{tpu_custom_call.1} parent=11 // pred_region
          _
        $region24: #{tpu_custom_call.1} parent=11 // pred_fallthru
          _
        // Predicated region
        $region25: #{tpu_custom_call.1} parent=11 // pred_check
          %p185 = pneg %p125
        $region26: #{tpu_custom_call.1} parent=11 // pred_check_branch
          %187 = sbr.rel (%p185) target = $region28
        $region27: #{tpu_custom_call.1} parent=11 // pred_region
          _
        $region28: #{tpu_custom_call.1} parent=11 // pred_fallthru
          _
      $region12: #{tpu_custom_call.1} parent=5 // pred_fallthru
        _
      %p188 = scmp.lt.s32.totalorder %s15, 2
      // Predicated region
      $region29: #{tpu_custom_call.1} parent=5 // pred_check
        %p189 = pneg %p188
      $region30: #{tpu_custom_call.1} parent=5 // pred_check_branch
        %191 = sbr.rel (%p189) target = $region32
      $region31: #{tpu_custom_call.1} parent=5 // pred_region
        // Predicated region
        $region33: #{tpu_custom_call.1} parent=31 // pred_check
          %p192 = pneg %p35
        $region34: #{tpu_custom_call.1} parent=31 // pred_check_branch
          %194 = sbr.rel (%p192) target = $region36
        $region35: #{tpu_custom_call.1} parent=31 // pred_region
          %p195 = scmp.lt.s32.totalorder %s15, 1
          %s196 = scalar_select %p195, %s15, 1
          %s197 = smul.addr %s196, 8
          %s198 = scalar_lea.vmem %s0, %s197
        $region36: #{tpu_custom_call.1} parent=31 // pred_fallthru
          _
      $region32: #{tpu_custom_call.1} parent=5 // pred_fallthru
        _
      %p199 = scmp.le.s32.totalorder 1, %s15
      %p200 = scmp.lt.s32.totalorder %s15, 3
      %p201 = pnand %p199, %p200
      %p202 = pneg %p201
      // Predicated region
      $region37: #{tpu_custom_call.1} parent=5 // pred_check
        _
      $region38: #{tpu_custom_call.1} parent=5 // pred_check_branch
        %204 = sbr.rel (%p201) target = $region40
      $region39: #{tpu_custom_call.1} parent=5 // pred_region
        %s205 = ssub.s32 %s15, 1
        // Predicated region
        $region41: #{tpu_custom_call.1} parent=39 // pred_check
          %p206 = pneg %p62
        $region42: #{tpu_custom_call.1} parent=39 // pred_check_branch
          %208 = sbr.rel (%p206) target = $region44
        $region43: #{tpu_custom_call.1} parent=39 // pred_region
          %209 = dma.done [#allocation3], 256
        $region44: #{tpu_custom_call.1} parent=39 // pred_fallthru
          _
        %p210 = scmp.lt.s32.totalorder %s20, 1
        %s211 = scalar_select %p210, %s20, 1
        %s212 = smul.addr %s211, 8
        %s213 = scalar_lea.vmem %s0, %s212
        %p214 = pneg %p41
        %p215 = pneg %p38
        %p216 = pneg %p62
        %p217 = pneg %p59
        %p218 = pneg %p83
        %p219 = pneg %p80
        %p220 = pneg %p104
        %p221 = pneg %p101
        %p222 = pneg %p125
        %p223 = pneg %p122
        %p224 = pneg %p151
        %p225 = pneg %p148
        %s226 = sand.u32 %s138, 1
        %s227 = scalar_lea.sflag [#allocation4], %s226
        %s228 = sand.u32 %s138, 1
        %s229 = smul.addr %s228, 8
        %s230 = scalar_lea.vmem [#allocation5], %s229
        %p231 = scmp.lt.s32.totalorder %s20, 1
        %s232 = scalar_select %p231, %s20, 1
        %s233 = smul.addr %s232, 8
        %s234 = scalar_lea.vmem %s0, %s233
        %v236 = vld [vmem:[%s234] sm:$0xff]
        %v237 = vpack.c.bf16 %v236, %v236
        %v238 = vld [vmem:[#allocation2] sm:$0xf]
        %v239 = vld [vmem:[#allocation2 + $0x4] sm:$0xf]
        %v240 = vld [vmem:[#allocation2 + $0x8] sm:$0xf]
        %v241 = vld [vmem:[#allocation2 + $0xc] sm:$0xf]
        %v242 = vld [vmem:[%s2] sm:$0x1]
        %v244 = vlaneseq
        %v245 = vshrl.u32 %v244, 7
        %v246 = vsub.s32 0, %v245
        %v247 = vrot.slane %v242, %v246
        %v253 = vunpack.c.l.b16 %v238
        %v254 = vunpack.c.l.b16 %v239
        %v255 = vunpack.c.l.b16 %v240
        %v256 = vunpack.c.l.b16 %v241
        %v257 = vpack.c.b16 %v254, %v253
        %v258 = vpack.c.b16 %v256, %v255
        %vm261 = vcmask 261120
        %v263 = vsel %vm261, %v237, 0
        %265 = vmatprep.subr.bf16.mxu0 0
        %266 = vmatpush1.bf16.msra.mxu0 %v257
        %267 = vmatprep.subr.bf16.mxu0 0
        %268 = vmatpush1.bf16.msra.mxu0 %v258
        %269 = vmatprep.subr.bf16.mxu0 0
        %270 = vmatpush1.bf16.msra.mxu0 0
        %271 = vmatprep.subr.bf16.mxu0 0
        %272 = vmatpush1.bf16.msra.mxu0 0
        %273 = vmatprep.subr.bf16.mxu0 0
        %274 = vmatpush1.bf16.msra.mxu0 0
        %275 = vmatprep.subr.bf16.mxu0 0
        %276 = vmatpush1.bf16.msra.mxu0 0
        %277 = vmatprep.subr.bf16.mxu0 0
        %278 = vmatpush1.bf16.msra.mxu0 0
        %279 = vmatprep.subr.bf16.mxu0 0
        %280 = vmatpush1.bf16.msra.mxu0 0
        %281 = vmatprep.subr.bf16.mxu0 0
        %282 = vmatpush1.bf16.msra.mxu0 0
        %283 = vmatprep.subr.bf16.mxu0 0
        %284 = vmatpush1.bf16.msra.mxu0 0
        %285 = vmatprep.subr.bf16.mxu0 0
        %286 = vmatpush1.bf16.msra.mxu0 0
        %287 = vmatprep.subr.bf16.mxu0 0
        %288 = vmatpush1.bf16.msra.mxu0 0
        %289 = vmatprep.subr.bf16.mxu0 0
        %290 = vmatpush1.bf16.msra.mxu0 0
        %291 = vmatprep.subr.bf16.mxu0 0
        %292 = vmatpush1.bf16.msra.mxu0 0
        %293 = vmatprep.subr.bf16.mxu0 0
        %294 = vmatpush1.bf16.msra.mxu0 0
        %295 = vmatprep.subr.bf16.mxu0 0
        %296 = vmatpush1.bf16.msra.mxu0 0
        %297 = vmatprep.mubr.bf16.mxu0 0
        %298 = vmatmul.mubr.bf16.gmra.mrb[0].mxu0 %v263
        %v299 = vpop.f32.mrb[0].mxu0
        %v300 = vadd.f32 %v247, %v299
        %v301 = vpop.f32.mrb[0].mxu0
        %v302 = vpop.f32.mrb[0].mxu0
        %v303 = vpop.f32.mrb[0].mxu0
        %304 = vdwg.mxu0
        %v305 = vmax.f32 %v300, 0.0
        %v306 = vpack.c.bf16 %v305, %v305
        %v307 = vld [vmem:[%s3] sm:$0xf]
        %v308 = vld [vmem:[%s3 + $0x4] sm:$0xf]
        %v309 = vld [vmem:[%s3 + $0x8] sm:$0xf]
        %v310 = vld [vmem:[%s3 + $0xc] sm:$0xf]
        %v311 = vld [vmem:[%s4] sm:$0x1]
        %v312 = vld [vmem:[%s4 + $0x1] sm:$0x1]
        %v313 = vld [vmem:[%s4 + $0x2] sm:$0x1]
        %v314 = vlaneseq
        %v315 = vshrl.u32 %v314, 7
        %v316 = vsub.s32 0, %v315
        %v317 = vrot.slane %v311, %v316
        %v322 = vunpack.c.l.b16 %v307
        %v323 = vunpack.c.l.b16 %v308
        %v324 = vunpack.c.l.b16 %v309
        %v325 = vunpack.c.l.b16 %v310
        %v326 = vpack.c.b16 %v323, %v322
        %v327 = vpack.c.b16 %v325, %v324
        %v331 = vsel %vm261, %v306, 0
        %333 = vmatprep.subr.bf16.mxu0 0
        %334 = vmatpush1.bf16.msra.mxu0 %v326
        %335 = vmatprep.subr.bf16.mxu0 0
        %336 = vmatpush1.bf16.msra.mxu0 %v327
        %337 = vmatprep.subr.bf16.mxu0 0
        %338 = vmatpush1.bf16.msra.mxu0 0
        %339 = vmatprep.subr.bf16.mxu0 0
        %340 = vmatpush1.bf16.msra.mxu0 0
        %341 = vmatprep.subr.bf16.mxu0 0
        %342 = vmatpush1.bf16.msra.mxu0 0
        %343 = vmatprep.subr.bf16.mxu0 0
        %344 = vmatpush1.bf16.msra.mxu0 0
        %345 = vmatprep.subr.bf16.mxu0 0
        %346 = vmatpush1.bf16.msra.mxu0 0
        %347 = vmatprep.subr.bf16.mxu0 0
        %348 = vmatpush1.bf16.msra.mxu0 0
        %349 = vmatprep.subr.bf16.mxu0 0
        %350 = vmatpush1.bf16.msra.mxu0 0
        %351 = vmatprep.subr.bf16.mxu0 0
        %352 = vmatpush1.bf16.msra.mxu0 0
        %353 = vmatprep.subr.bf16.mxu0 0
        %354 = vmatpush1.bf16.msra.mxu0 0
        %355 = vmatprep.subr.bf16.mxu0 0
        %356 = vmatpush1.bf16.msra.mxu0 0
        %357 = vmatprep.subr.bf16.mxu0 0
        %358 = vmatpush1.bf16.msra.mxu0 0
        %359 = vmatprep.subr.bf16.mxu0 0
        %360 = vmatpush1.bf16.msra.mxu0 0
        %361 = vmatprep.subr.bf16.mxu0 0
        %362 = vmatpush1.bf16.msra.mxu0 0
        %363 = vmatprep.subr.bf16.mxu0 0
        %364 = vmatpush1.bf16.msra.mxu0 0
        %365 = vmatprep.mubr.bf16.mxu0 0
        %366 = vmatmul.mubr.bf16.gmra.mrb[0].mxu0 %v331
        %v367 = vpop.f32.mrb[0].mxu0
        %v368 = vadd.f32 %v317, %v367
        %v369 = vpop.f32.mrb[0].mxu0
        %v370 = vpop.f32.mrb[0].mxu0
        %v371 = vpop.f32.mrb[0].mxu0
        %372 = vdwg.mxu0
        %v373 = vmax.f32 %v368, 0.0
        %v374 = vlaneseq
        %v375 = vshrl.u32 %v374, 7
        %v376 = vsub.s32 0, %v375
        %v377 = vrot.slane %v312, %v376
        %v378 = vmul.f32 %v373, %v377
        %v379 = vlaneseq
        %v380 = vshrl.u32 %v379, 7
        %v381 = vsub.s32 0, %v380
        %v382 = vrot.slane %v313, %v381
        %v383 = vadd.f32 %v378, %v382
        %vm384 = vcmask 130048
        %385 = vst.msk [vmem:[%s230] sm:$0xff] %vm384, %v383
        %s386 = sand.u32 %s138, 1
        %s387 = scalar_lea.sflag [#allocation4], %s386
        %s388 = sand.u32 %s138, 1
        %s389 = smul.addr %s388, 8
        %s390 = scalar_lea.vmem [#allocation5], %s389
        // Predicated region
        $region45: #{tpu_custom_call.1} parent=39 // pred_check
          %p391 = pneg %p148
        $region46: #{tpu_custom_call.1} parent=39 // pred_check_branch
          %393 = sbr.rel (%p391) target = $region48
        $region47: #{tpu_custom_call.1} parent=39 // pred_region
          %s395 = ssub.s32 128, 128
          %396 = vsyncadd %s387, %s395
          %s397 = smul.addr %s20, 128
          %s398 = scalar_lea.hbm %s5, %s397
          %s400 = sshll.u32 %s390, 4
          %s401 = int_to_ptr.vmem [resolvable:$true] %s400
          %403 = dma.vmem_to_hbm [thread:$0]  %s401, 128, %s398, %s387
        $region48: #{tpu_custom_call.1} parent=39 // pred_fallthru
          _
      $region40: #{tpu_custom_call.1} parent=5 // pred_fallthru
        _
      %p404 = scmp.le.s32.totalorder 2, %s15
      // Predicated region
      $region49: #{tpu_custom_call.1} parent=5 // pred_check
        %p405 = pneg %p404
      $region50: #{tpu_custom_call.1} parent=5 // pred_check_branch
        %407 = sbr.rel (%p405) target = $region52
      $region51: #{tpu_custom_call.1} parent=5 // pred_region
        %s408 = ssub.s32 %s15, 2
        // Predicated region
        $region53: #{tpu_custom_call.1} parent=51 // pred_check
          %p409 = pneg %p154
        $region54: #{tpu_custom_call.1} parent=51 // pred_check_branch
          %411 = sbr.rel (%p409) target = $region56
        $region55: #{tpu_custom_call.1} parent=51 // pred_region
          %s412 = sand.u32 %s139, 1
          %s413 = scalar_lea.sflag [#allocation4], %s412
          %s414 = sand.u32 %s139, 1
          %s415 = smul.addr %s414, 8
          %s416 = scalar_lea.vmem [#allocation5], %s415
          %417 = dma.done %s413, 128
        $region56: #{tpu_custom_call.1} parent=51 // pred_fallthru
          _
      $region52: #{tpu_custom_call.1} parent=5 // pred_fallthru
        _
    $region6: #{tpu_custom_call.1} parent=1 // loop_footer
      %s19 = sadd.s32 1, %s15
    $region7: #{tpu_custom_call.1} parent=1 // loop_footer_branch
      %14 = sbr.rel target = $region3
    $region8: #{tpu_custom_call.1} parent=1 // loop_exit
      _
    %418 = vsyncpa [#allocation3], 1
    %s419 = scalar_lea.sflag [#allocation3], 1
    %420 = vsyncpa %s419, 1
    %421 = vsyncpa [#allocation4], 1
    %s422 = scalar_lea.sflag [#allocation4], 1
    %423 = vsyncpa %s422, 1

</llo_original>
